<compile_context>
chip_gen: v6e
topology: v6e:2x2x1
jax: 0.10.0
libtpu: 0.0.40
codegen_flags: <defaults>
</compile_context>

<pallas_src>
import functools

import jax
import jax.numpy as jnp
from jax.experimental import pallas as pl
from jax.experimental.pallas import tpu as pltpu


def _round_up(x, m):
    return ((x + m - 1) // m) * m


def step_layer_forward(x, conv1_w, conv1_b, *, mxu_dtype=jnp.bfloat16):
    """StepLayer.forward: conv1(x), a 3x3 conv with stride 1 and zero padding 1."""
    N, C, H, W = x.shape
    C_out, C_in, KH, KW = conv1_w.shape
    assert C_in == C and KH == 3 and KW == 3

    isz = jnp.dtype(mxu_dtype).itemsize
    use_f32 = jnp.dtype(mxu_dtype) == jnp.dtype(jnp.float32)
    k_mult = 8 * (4 // isz)                  # operand sublane multiple: 8 (f32) / 16 (bf16)

    # Padded channel dims: keeps every in-kernel slice/concat tile-aligned and
    # the MXU result rows / output stores full.
    Cop = _round_up(C_out, 8)                # f32 result-row sublane multiple
    Cpt = _round_up(C, k_mult)               # per-tap channel rows (zero-padded)
    Kp = 9 * Cpt                             # contraction length (already a k_mult multiple)

    # Flattened-spatial geometry (row stride W+2).
    Wp = W + 2
    Lout = H * Wp                            # useful flat output extent
    Lout_pad = _round_up(Lout, 128)          # full-lane, unmasked output stores
    max_shift = 2 * Wp + 2                   # largest tap shift (dy=dx=2)
    Lin = _round_up(Lout_pad + max_shift, 128)

    # --- activations: one cheap zero-pad pass, no transposes, no 9x slab -----
    x_p = jnp.pad(x, ((0, 0), (0, Cpt - C), (1, 1), (1, 1)))       # (N, Cpt, H+2, W+2)
    x_flat = x_p.reshape(N, Cpt, (H + 2) * Wp)
    x_flat = jnp.pad(x_flat, ((0, 0), (0, 0), (0, Lin - (H + 2) * Wp)))
    x_flat = x_flat.astype(mxu_dtype)                               # (N, Cpt, Lin)

    # --- weights: (C_out, C, 3, 3) -> tap-major (Cop, 9*Cpt) im2col matrix ---
    w_t = jnp.transpose(conv1_w, (0, 2, 3, 1))                      # (C_out, 3, 3, C)
    w_t = jnp.pad(w_t, ((0, 0), (0, 0), (0, 0), (0, Cpt - C)))
    w_mat = w_t.reshape(C_out, Kp)
    w_mat = jnp.pad(w_mat, ((0, Cop - C_out), (0, 0))).astype(mxu_dtype)
    b_col = jnp.pad(conv1_b, (0, Cop - C_out)).reshape(Cop, 1).astype(jnp.float32)

    # --- grid-step sizing: fold images per step until per-step work beats the
    #     ~0.35us step overhead, while staying inside a v7x-safe VMEM budget. ---
    vmem_budget = 40 * 1024 * 1024           # safe on v7x (64 MiB phys); v5e/v6e have 128 MiB
    per_img_bytes = 2 * (Cpt * Lin * isz + Cop * Lout_pad * 4)      # double-buffered blocks
    fixed_bytes = 2 * (Cop * Kp * isz + Cop * 4) + 2 * Kp * Lout_pad * isz  # w/b + patch slack
    per_img_flops = 2 * Kp * Cop * Lout_pad
    min_step_flops = 2 * 10 ** 7             # below this, extra grid steps are pure overhead
    nb = 1
    for cand in range(1, min(N, 8) + 1):
        if N % cand:
            continue
        if fixed_bytes + cand * per_img_bytes > vmem_budget:
            break
        nb = cand
        if cand * per_img_flops >= min_step_flops:
            break
    assert fixed_bytes + nb * per_img_bytes <= vmem_budget, (
        "per-step blocks exceed the VMEM budget; add K / spatial tiling for this size")
    vmem_limit = int(min(vmem_budget,
                         max(16 * 1024 * 1024,
                             2 * (fixed_bytes + nb * per_img_bytes))))
    grid = (N // nb,)

    shifts = tuple(dy * Wp + dx for dy in range(3) for dx in range(3))
    dot_precision = jax.lax.Precision.HIGHEST if use_f32 else None

    def conv_kernel(w_ref, b_ref, x_ref, o_ref):
        # w_ref: (Cop, Kp)        grid-invariant im2col weight (mxu dtype)
        # b_ref: (Cop, 1)         grid-invariant bias, f32
        # x_ref: (nb, Cpt, Lin)   flattened zero-padded images (mxu dtype)
        # o_ref: (nb, Cop, Lout_pad)  f32, lane-dense
        w = w_ref[...]
        b = b_ref[...]
        for i in range(nb):                                   # static unroll; nb kept small
            xi = x_ref[i]                                     # (Cpt, Lin)
            # In-kernel im2col: 9 static lane-shifted slices of the haloed tile
            # (XLU lane rotations), stacked along tile-aligned sublane blocks.
            patch = jnp.concatenate(
                [xi[:, s:s + Lout_pad] for s in shifts], axis=0)   # (Kp, Lout_pad)
            acc = jnp.dot(w, patch, preferred_element_type=jnp.float32,
                          precision=dot_precision)            # single MXU matmul
            o_ref[i] = (acc + b).astype(o_ref.dtype)

    cost = pl.CostEstimate(
        flops=2 * 9 * C * C_out * N * H * W,
        transcendentals=0,
        bytes_accessed=(N * Cpt * Lin * isz + N * Cop * Lout_pad * 4
                        + Cop * Kp * isz + Cop * 4))

    out_flat = pl.pallas_call(
        conv_kernel,
        out_shape=jax.ShapeDtypeStruct((N, Cop, Lout_pad), jnp.float32),
        grid_spec=pltpu.PrefetchScalarGridSpec(
            num_scalar_prefetch=0,
            grid=grid,
            in_specs=[
                pl.BlockSpec((Cop, Kp), lambda b: (0, 0)),         # weight (resident)
                pl.BlockSpec((Cop, 1), lambda b: (0, 0)),          # bias   (resident)
                pl.BlockSpec((nb, Cpt, Lin), lambda b: (b, 0, 0)), # nb images / step
            ],
            out_specs=pl.BlockSpec((nb, Cop, Lout_pad), lambda b: (b, 0, 0)),
        ),
        compiler_params=pltpu.CompilerParams(
            dimension_semantics=("parallel",),
            vmem_limit_bytes=vmem_limit),
        cost_estimate=cost,
    )(w_mat, b_col, x_flat)

    # (N, Cop, Lout_pad) -> (N, C_out, H, W): drop padded rows / junk columns.
    out = out_flat[:, :C_out, :Lout].reshape(N, C_out, H, Wp)[..., :W]
    return out.astype(x.dtype)


def init_step_layer_params(key, channels):
    """Deterministic synthetic parameters with the shapes StepLayer.__init__ creates."""
    k1, k2, k3, k4 = jax.random.split(key, 4)
    fan_in = channels * 3 * 3
    bound = 1.0 / jnp.sqrt(fan_in)
    conv1_w = jax.random.uniform(k1, (channels, channels, 3, 3), jnp.float32, -bound, bound)
    conv1_b = jax.random.uniform(k2, (channels,), jnp.float32, -bound, bound)
    # conv2 exists in __init__ but is unused by forward; kept for shape fidelity.
    conv2_w = jax.random.uniform(k3, (channels, channels, 3, 3), jnp.float32, -bound, bound)
    conv2_b = jax.random.uniform(k4, (channels,), jnp.float32, -bound, bound)
    return (conv1_w, conv1_b), (conv2_w, conv2_b)


if __name__ == "__main__":
    N, C, H, W = 2, 4, 16, 16
    key = jax.random.PRNGKey(0)
    kx, kp = jax.random.split(key)
    x = jax.random.normal(kx, (N, C, H, W), jnp.float32)
    (conv1_w, conv1_b), _ = init_step_layer_params(kp, C)

    fwd_bf16 = jax.jit(step_layer_forward)
    fwd_f32 = jax.jit(functools.partial(step_layer_forward, mxu_dtype=jnp.float32))

    out = jax.block_until_ready(fwd_bf16(x, conv1_w, conv1_b))       # fast default path
    out_f32 = jax.block_until_ready(fwd_f32(x, conv1_w, conv1_b))    # high-precision path

    ref = jax.lax.conv_general_dilated(
        x, conv1_w, window_strides=(1, 1), padding=((1, 1), (1, 1)),
        dimension_numbers=("NCHW", "OIHW", "NCHW"),
        precision=jax.lax.Precision.HIGHEST,
    ) + conv1_b.reshape(1, C, 1, 1)

    assert out.shape == (N, C, H, W)
    assert out_f32.shape == (N, C, H, W)
    assert jnp.allclose(out_f32, ref, atol=1e-3, rtol=1e-3), "f32-path mismatch"
    assert jnp.allclose(out, ref, atol=6e-2, rtol=5e-2), "bf16-path mismatch"

    print("KERNEL_OK")
</pallas_src>

<mosaic_0001>
module attributes {stable_mosaic.version = 11 : i64} {
  func.func @conv_kernel(%arg0: i32, %arg1: memref<8x144xbf16, #tpu.memory_space<vmem>>, %arg2: memref<8x1xf32, #tpu.memory_space<vmem>>, %arg3: memref<2x16x512xbf16, #tpu.memory_space<vmem>>, %arg4: memref<2x8x384xf32, #tpu.memory_space<vmem>>) attributes {dimension_semantics = [#tpu.dimension_semantics<parallel>], iteration_bounds = array<i64: 1>, scalar_prefetch = 0 : i64, scratch_operands = 0 : i64, tpu.core_type = #tpu.core_type<tc>, window_params = [{pipeline_mode = #tpu.pipeline_mode<synchronous>, transform_indices = @transform_0, window_bounds = array<i64: 8, 144>}, {pipeline_mode = #tpu.pipeline_mode<synchronous>, transform_indices = @transform_1, window_bounds = array<i64: 8, 1>}, {transform_indices = @transform_2, window_bounds = array<i64: 2, 16, 512>}, {transform_indices = @transform_3, window_bounds = array<i64: 2, 8, 384>}]} {
    %c0 = arith.constant 0 : index
    %c0_0 = arith.constant 0 : index
    %0 = vector.load %arg1[%c0, %c0_0] : memref<8x144xbf16, #tpu.memory_space<vmem>>, vector<8x144xbf16>
    %c0_1 = arith.constant 0 : index
    %c0_2 = arith.constant 0 : index
    %1 = vector.load %arg2[%c0_1, %c0_2] : memref<8x1xf32, #tpu.memory_space<vmem>>, vector<8x1xf32>
    %c0_3 = arith.constant 0 : index
    %c0_4 = arith.constant 0 : index
    %c0_5 = arith.constant 0 : index
    %2 = vector.load %arg3[%c0_3, %c0_4, %c0_5] : memref<2x16x512xbf16, #tpu.memory_space<vmem>>, vector<1x16x512xbf16>
    %3 = vector.shape_cast %2 : vector<1x16x512xbf16> to vector<16x512xbf16>
    %4 = vector.extract_strided_slice %3 {offsets = [0, 0], sizes = [16, 384], strides = [1, 1]} : vector<16x512xbf16> to vector<16x384xbf16>
    %5 = vector.extract_strided_slice %3 {offsets = [0, 1], sizes = [16, 384], strides = [1, 1]} : vector<16x512xbf16> to vector<16x384xbf16>
    %6 = vector.extract_strided_slice %3 {offsets = [0, 2], sizes = [16, 384], strides = [1, 1]} : vector<16x512xbf16> to vector<16x384xbf16>
    %7 = vector.extract_strided_slice %3 {offsets = [0, 18], sizes = [16, 384], strides = [1, 1]} : vector<16x512xbf16> to vector<16x384xbf16>
    %8 = vector.extract_strided_slice %3 {offsets = [0, 19], sizes = [16, 384], strides = [1, 1]} : vector<16x512xbf16> to vector<16x384xbf16>
    %9 = vector.extract_strided_slice %3 {offsets = [0, 20], sizes = [16, 384], strides = [1, 1]} : vector<16x512xbf16> to vector<16x384xbf16>
    %10 = vector.extract_strided_slice %3 {offsets = [0, 36], sizes = [16, 384], strides = [1, 1]} : vector<16x512xbf16> to vector<16x384xbf16>
    %11 = vector.extract_strided_slice %3 {offsets = [0, 37], sizes = [16, 384], strides = [1, 1]} : vector<16x512xbf16> to vector<16x384xbf16>
    %12 = vector.extract_strided_slice %3 {offsets = [0, 38], sizes = [16, 384], strides = [1, 1]} : vector<16x512xbf16> to vector<16x384xbf16>
    %13 = tpu.concatenate %4, %5, %6, %7, %8, %9, %10, %11, %12 in 0 : vector<16x384xbf16>, vector<16x384xbf16>, vector<16x384xbf16>, vector<16x384xbf16>, vector<16x384xbf16>, vector<16x384xbf16>, vector<16x384xbf16>, vector<16x384xbf16>, vector<16x384xbf16> -> vector<144x384xbf16>
    %cst = arith.constant dense<0.000000e+00> : vector<8x384xf32>
    %14 = tpu.matmul %0, %13, %cst {dimension_numbers = #tpu.dot_dimension_numbers<[1], [0], [0], [1], [0, 0, 1, 1], [], []>} : vector<8x144xbf16>, vector<144x384xbf16>, vector<8x384xf32> -> vector<8x384xf32>
    %15 = vector.broadcast %1 : vector<8x1xf32> to vector<8x384xf32>
    %16 = arith.addf %14, %15 : vector<8x384xf32>
    %c0_6 = arith.constant 0 : index
    %c0_7 = arith.constant 0 : index
    %c0_8 = arith.constant 0 : index
    %17 = vector.load %arg4[%c0_6, %c0_7, %c0_8] : memref<2x8x384xf32, #tpu.memory_space<vmem>>, vector<1x8x384xf32>
    %18 = vector.shape_cast %17 : vector<1x8x384xf32> to vector<8x384xf32>
    %19 = vector.shape_cast %16 : vector<8x384xf32> to vector<1x8x384xf32>
    tpu.vector_store %arg4[%c0_6, %c0_7, %c0_8], %19 {strides = array<i32>} : memref<2x8x384xf32, #tpu.memory_space<vmem>>, vector<1x8x384xf32>,
    %c1 = arith.constant 1 : index
    %c0_9 = arith.constant 0 : index
    %c0_10 = arith.constant 0 : index
    %20 = vector.load %arg3[%c1, %c0_9, %c0_10] : memref<2x16x512xbf16, #tpu.memory_space<vmem>>, vector<1x16x512xbf16>
    %21 = vector.shape_cast %20 : vector<1x16x512xbf16> to vector<16x512xbf16>
    %22 = vector.extract_strided_slice %21 {offsets = [0, 0], sizes = [16, 384], strides = [1, 1]} : vector<16x512xbf16> to vector<16x384xbf16>
    %23 = vector.extract_strided_slice %21 {offsets = [0, 1], sizes = [16, 384], strides = [1, 1]} : vector<16x512xbf16> to vector<16x384xbf16>
    %24 = vector.extract_strided_slice %21 {offsets = [0, 2], sizes = [16, 384], strides = [1, 1]} : vector<16x512xbf16> to vector<16x384xbf16>
    %25 = vector.extract_strided_slice %21 {offsets = [0, 18], sizes = [16, 384], strides = [1, 1]} : vector<16x512xbf16> to vector<16x384xbf16>
    %26 = vector.extract_strided_slice %21 {offsets = [0, 19], sizes = [16, 384], strides = [1, 1]} : vector<16x512xbf16> to vector<16x384xbf16>
    %27 = vector.extract_strided_slice %21 {offsets = [0, 20], sizes = [16, 384], strides = [1, 1]} : vector<16x512xbf16> to vector<16x384xbf16>
    %28 = vector.extract_strided_slice %21 {offsets = [0, 36], sizes = [16, 384], strides = [1, 1]} : vector<16x512xbf16> to vector<16x384xbf16>
    %29 = vector.extract_strided_slice %21 {offsets = [0, 37], sizes = [16, 384], strides = [1, 1]} : vector<16x512xbf16> to vector<16x384xbf16>
    %30 = vector.extract_strided_slice %21 {offsets = [0, 38], sizes = [16, 384], strides = [1, 1]} : vector<16x512xbf16> to vector<16x384xbf16>
    %31 = tpu.concatenate %22, %23, %24, %25, %26, %27, %28, %29, %30 in 0 : vector<16x384xbf16>, vector<16x384xbf16>, vector<16x384xbf16>, vector<16x384xbf16>, vector<16x384xbf16>, vector<16x384xbf16>, vector<16x384xbf16>, vector<16x384xbf16>, vector<16x384xbf16> -> vector<144x384xbf16>
    %cst_11 = arith.constant dense<0.000000e+00> : vector<8x384xf32>
    %32 = tpu.matmul %0, %31, %cst_11 {dimension_numbers = #tpu.dot_dimension_numbers<[1], [0], [0], [1], [0, 0, 1, 1], [], []>} : vector<8x144xbf16>, vector<144x384xbf16>, vector<8x384xf32> -> vector<8x384xf32>
    %33 = vector.broadcast %1 : vector<8x1xf32> to vector<8x384xf32>
    %34 = arith.addf %32, %33 : vector<8x384xf32>
    %c1_12 = arith.constant 1 : index
    %c0_13 = arith.constant 0 : index
    %c0_14 = arith.constant 0 : index
    %35 = vector.load %arg4[%c1_12, %c0_13, %c0_14] : memref<2x8x384xf32, #tpu.memory_space<vmem>>, vector<1x8x384xf32>
    %36 = vector.shape_cast %35 : vector<1x8x384xf32> to vector<8x384xf32>
    %37 = vector.shape_cast %34 : vector<8x384xf32> to vector<1x8x384xf32>
    tpu.vector_store %arg4[%c1_12, %c0_13, %c0_14], %37 {strides = array<i32>} : memref<2x8x384xf32, #tpu.memory_space<vmem>>, vector<1x8x384xf32>,
    return
  }
  func.func @transform_0(%arg0: i32) -> (i32, i32) {
    %c0_i32 = arith.constant 0 : i32
    %c0_i32_0 = arith.constant 0 : i32
    %c0_i32_1 = arith.constant 0 : i32
    return %c0_i32, %c0_i32_0 : i32, i32
  }
  func.func @transform_1(%arg0: i32) -> (i32, i32) {
    %c0_i32 = arith.constant 0 : i32
    %c0_i32_0 = arith.constant 0 : i32
    %c0_i32_1 = arith.constant 0 : i32
    return %c0_i32, %c0_i32_0 : i32, i32
  }
  func.func @transform_2(%arg0: i32) -> (i32, i32, i32) {
    %c0_i32 = arith.constant 0 : i32
    %c0_i32_0 = arith.constant 0 : i32
    %c0_i32_1 = arith.constant 0 : i32
    return %arg0, %c0_i32, %c0_i32_0 : i32, i32, i32
  }
  func.func @transform_3(%arg0: i32) -> (i32, i32, i32) {
    %c0_i32 = arith.constant 0 : i32
    %c0_i32_0 = arith.constant 0 : i32
    %c0_i32_1 = arith.constant 0 : i32
    return %arg0, %c0_i32, %c0_i32_0 : i32, i32, i32
  }
}

</mosaic_0001>

<llo_original>
// kernel: step_layer_forward.1
$region0: #{step_layer_forward.1}
  #allocation0 [shape = 'u32[]', space=smem, size = 0x4, offset = 0x4, fixed_abs, tag = 'smem constant byte address 0x4 - core index']
  #allocation1 [shape = 'u32[144,128]{1,0:T(1,128)}', space=vmem, size = 0x12000, scoped, tag = 'internal scratch']
  %s0 = inlined_call_operand.vmem [shape: bf16[8,144], index: 0, kind: input, shape index: {}]
  %s1 = inlined_call_operand.vmem [shape: f32[8,1], index: 1, kind: input, shape index: {}]
  %s2 = inlined_call_operand.vmem [shape: bf16[2,16,512], index: 2, kind: input, shape index: {}]
  %s3 = inlined_call_operand.vmem [shape: f32[2,8,384], index: 3, kind: output, shape index: {}]
  %s4 = sld [smem:[#allocation0]]
  $region22: #{step_layer_forward.1} parent=0
    _
  %s6 = ssub.s32 1, %s4
  %s7 = scalar_select 0, %s6, %s4
  // Predicated region
  $region2: #{step_layer_forward.1} parent=0 // pred_check
    _
  $region3: #{step_layer_forward.1} parent=0 // pred_check_branch
    %9 = sbr.rel (0) target = $region5
  $region4: #{step_layer_forward.1} parent=0 // pred_region
    _
  $region5: #{step_layer_forward.1} parent=0 // pred_fallthru
    _
  // Predicated region
  $region6: #{step_layer_forward.1} parent=0 // pred_check
    _
  $region7: #{step_layer_forward.1} parent=0 // pred_check_branch
    %11 = sbr.rel (0) target = $region9
  $region8: #{step_layer_forward.1} parent=0 // pred_region
    _
  $region9: #{step_layer_forward.1} parent=0 // pred_fallthru
    _
  // Predicated region
  $region10: #{step_layer_forward.1} parent=0 // pred_check
    _
  $region11: #{step_layer_forward.1} parent=0 // pred_check_branch
    %13 = sbr.rel (0) target = $region13
  $region12: #{step_layer_forward.1} parent=0 // pred_region
    _
  $region13: #{step_layer_forward.1} parent=0 // pred_fallthru
    _
  %v15 = vld [vmem:[%s0] sm:$0xff]
  %v16 = vld [vmem:[%s1] sm:$0xff]
  %v17 = vld [vmem:[%s2] sm:$0xff]
  %v18 = vld [vmem:[%s2 + $0x8] sm:$0xff]
  %v19 = vld [vmem:[%s2 + $0x10] sm:$0xff]
  %v20 = vld [vmem:[%s2 + $0x18] sm:$0xff]
  %v25 = vunpack.c.l.b16 %v17
  %v26 = vunpack.c.h.b16 %v17
  %v27 = vunpack.c.l.b16 %v18
  %v28 = vunpack.c.l.b16 %v19
  %v29 = vunpack.c.h.b16 %v19
  %v30 = vunpack.c.l.b16 %v20
  %v31 = vpack.c.b16 %v28, %v25
  %v32 = vpack.c.b16 %v29, %v26
  %v33 = vpack.c.b16 %v30, %v27
  %v37 = vunpack.c.h.b16 %v18
  %v38 = vunpack.c.h.b16 %v20
  %v39 = vpack.c.b16 %v38, %v37
  %40 = vrot.lane.b32.xlu0 %v31, 127
  %v41 = vpop.permute.xlu0 %40
  %42 = vrot.lane.b32.xlu0 %v32, 127
  %v43 = vpop.permute.xlu0 %42
  %44 = vrot.lane.b32.xlu0 %v33, 127
  %v45 = vpop.permute.xlu0 %44
  %46 = vrot.lane.b32.xlu0 %v39, 127
  %v47 = vpop.permute.xlu0 %46
  %vm48 = vcmask 1039360
  %v49 = vsel %vm48, %v41, %v43
  %v50 = vsel %vm48, %v43, %v45
  %v51 = vsel %vm48, %v45, %v47
  %55 = vrot.lane.b32.xlu0 %v31, 126
  %v56 = vpop.permute.xlu0 %55
  %57 = vrot.lane.b32.xlu0 %v32, 126
  %v58 = vpop.permute.xlu0 %57
  %59 = vrot.lane.b32.xlu0 %v33, 126
  %v60 = vpop.permute.xlu0 %59
  %61 = vrot.lane.b32.xlu0 %v39, 126
  %v62 = vpop.permute.xlu0 %61
  %vm63 = vcmask 1031168
  %v64 = vsel %vm63, %v56, %v58
  %v65 = vsel %vm63, %v58, %v60
  %v66 = vsel %vm63, %v60, %v62
  %70 = vrot.lane.b32.xlu0 %v31, 110
  %v71 = vpop.permute.xlu0 %70
  %72 = vrot.lane.b32.xlu0 %v32, 110
  %v73 = vpop.permute.xlu0 %72
  %74 = vrot.lane.b32.xlu0 %v33, 110
  %v75 = vpop.permute.xlu0 %74
  %76 = vrot.lane.b32.xlu0 %v39, 110
  %v77 = vpop.permute.xlu0 %76
  %vm78 = vcmask 900096
  %v79 = vsel %vm78, %v71, %v73
  %v80 = vsel %vm78, %v73, %v75
  %v81 = vsel %vm78, %v75, %v77
  %85 = vrot.lane.b32.xlu0 %v31, 109
  %v86 = vpop.permute.xlu0 %85
  %87 = vrot.lane.b32.xlu0 %v32, 109
  %v88 = vpop.permute.xlu0 %87
  %89 = vrot.lane.b32.xlu0 %v33, 109
  %v90 = vpop.permute.xlu0 %89
  %91 = vrot.lane.b32.xlu0 %v39, 109
  %v92 = vpop.permute.xlu0 %91
  %vm93 = vcmask 891904
  %v94 = vsel %vm93, %v86, %v88
  %v95 = vsel %vm93, %v88, %v90
  %v96 = vsel %vm93, %v90, %v92
  %100 = vrot.lane.b32.xlu0 %v31, 108
  %v101 = vpop.permute.xlu0 %100
  %102 = vrot.lane.b32.xlu0 %v32, 108
  %v103 = vpop.permute.xlu0 %102
  %104 = vrot.lane.b32.xlu0 %v33, 108
  %v105 = vpop.permute.xlu0 %104
  %106 = vrot.lane.b32.xlu0 %v39, 108
  %v107 = vpop.permute.xlu0 %106
  %vm108 = vcmask 883712
  %v109 = vsel %vm108, %v101, %v103
  %v110 = vsel %vm108, %v103, %v105
  %v111 = vsel %vm108, %v105, %v107
  %115 = vrot.lane.b32.xlu0 %v31, 92
  %v116 = vpop.permute.xlu0 %115
  %117 = vrot.lane.b32.xlu0 %v32, 92
  %v118 = vpop.permute.xlu0 %117
  %119 = vrot.lane.b32.xlu0 %v33, 92
  %v120 = vpop.permute.xlu0 %119
  %121 = vrot.lane.b32.xlu0 %v39, 92
  %v122 = vpop.permute.xlu0 %121
  %vm123 = vcmask 752640
  %v124 = vsel %vm123, %v116, %v118
  %v125 = vsel %vm123, %v118, %v120
  %v126 = vsel %vm123, %v120, %v122
  %130 = vrot.lane.b32.xlu0 %v31, 91
  %v131 = vpop.permute.xlu0 %130
  %132 = vrot.lane.b32.xlu0 %v32, 91
  %v133 = vpop.permute.xlu0 %132
  %134 = vrot.lane.b32.xlu0 %v33, 91
  %v135 = vpop.permute.xlu0 %134
  %136 = vrot.lane.b32.xlu0 %v39, 91
  %v137 = vpop.permute.xlu0 %136
  %vm138 = vcmask 744448
  %v139 = vsel %vm138, %v131, %v133
  %v140 = vsel %vm138, %v133, %v135
  %v141 = vsel %vm138, %v135, %v137
  %145 = vrot.lane.b32.xlu0 %v31, 90
  %v146 = vpop.permute.xlu0 %145
  %147 = vrot.lane.b32.xlu0 %v32, 90
  %v148 = vpop.permute.xlu0 %147
  %149 = vrot.lane.b32.xlu0 %v33, 90
  %v150 = vpop.permute.xlu0 %149
  %151 = vrot.lane.b32.xlu0 %v39, 90
  %v152 = vpop.permute.xlu0 %151
  %vm153 = vcmask 736256
  %v154 = vsel %vm153, %v146, %v148
  %v155 = vsel %vm153, %v148, %v150
  %v156 = vsel %vm153, %v150, %v152
  %161 = vset.pattern.permute.xlu0 0
  %162 = vperm.xlu0 %161, %v16
  %v163 = vpop.permute.xlu0 %162
  %v166 = vunpack.c.l.b16 %v15
  %v167 = vunpack.c.h.b16 %v15
  %v168 = vpack.c.b16 %v166, %v166
  %v169 = vpack.c.b16 %v167, %v167
  %vm171 = vcmask 130048
  %v173 = vsel %vm171, %v169, 0
  %175 = vmatprep.subr.bf16.mxu0 %v140
  %176 = vmatpush1.bf16.msra.mxu0 %v139
  %177 = vmatprep.subr.bf16.mxu0 %v125
  %178 = vmatpush1.bf16.msra.mxu0 %v124
  %179 = vmatprep.subr.bf16.mxu0 %v110
  %180 = vmatpush1.bf16.msra.mxu0 %v109
  %181 = vmatprep.subr.bf16.mxu0 %v95
  %182 = vmatpush1.bf16.msra.mxu0 %v94
  %183 = vmatprep.subr.bf16.mxu0 %v80
  %184 = vmatpush1.bf16.msra.mxu0 %v79
  %185 = vmatprep.subr.bf16.mxu0 %v65
  %186 = vmatpush1.bf16.msra.mxu0 %v64
  %187 = vmatprep.subr.bf16.mxu0 %v50
  %188 = vmatpush1.bf16.msra.mxu0 %v49
  %189 = vmatprep.subr.bf16.mxu0 %v32
  %190 = vmatpush1.bf16.msra.mxu0 %v31
  %191 = vmatprep.subr.bf16.mxu0 0
  %192 = vmatpush2.bf16.msra.mxu0 0
  %193 = vmatprep.subr.bf16.mxu0 0
  %194 = vmatpush2.bf16.msra.mxu0 0
  %195 = vmatprep.subr.bf16.mxu0 0
  %196 = vmatpush2.bf16.msra.mxu0 0
  %197 = vmatprep.subr.bf16.mxu0 0
  %198 = vmatpush2.bf16.msra.mxu0 0
  %199 = vmatprep.subr.bf16.mxu0 0
  %200 = vmatpush2.bf16.msra.mxu0 0
  %201 = vmatprep.subr.bf16.mxu0 0
  %202 = vmatpush2.bf16.msra.mxu0 0
  %203 = vmatprep.subr.bf16.mxu0 0
  %204 = vmatpush2.bf16.msra.mxu0 0
  %205 = vmatprep.subr.bf16.mxu0 %v155
  %206 = vmatpush2.bf16.msra.mxu0 %v154
  %207 = vmatprep.mubr.bf16.mxu0 %v173
  %208 = vmatmul.mubr.bf16.gmra.mxu0 %v168
  %v209 = vpop.f32.mrf.mxu0
  %v210 = vadd.f32 %v163, %v209
  %v211 = vpop.f32.mrf.mxu0
  %v212 = vadd.f32 %v163, %v211
  %v213 = vpop.f32.mrf.mxu0
  %v214 = vpop.f32.mrf.mxu0
  %215 = vdwg.mxu0
  %216 = vmatprep.subr.bf16.mxu0 0
  %217 = vmatpush1.bf16.msra.mxu0 %v141
  %218 = vmatprep.subr.bf16.mxu0 0
  %219 = vmatpush1.bf16.msra.mxu0 %v126
  %220 = vmatprep.subr.bf16.mxu0 0
  %221 = vmatpush1.bf16.msra.mxu0 %v111
  %222 = vmatprep.subr.bf16.mxu0 0
  %223 = vmatpush1.bf16.msra.mxu0 %v96
  %224 = vmatprep.subr.bf16.mxu0 0
  %225 = vmatpush1.bf16.msra.mxu0 %v81
  %226 = vmatprep.subr.bf16.mxu0 0
  %227 = vmatpush1.bf16.msra.mxu0 %v66
  %228 = vmatprep.subr.bf16.mxu0 0
  %229 = vmatpush1.bf16.msra.mxu0 %v51
  %230 = vmatprep.subr.bf16.mxu0 0
  %231 = vmatpush1.bf16.msra.mxu0 %v33
  %232 = vmatprep.subr.bf16.mxu0 0
  %233 = vmatpush2.bf16.msra.mxu0 0
  %234 = vmatprep.subr.bf16.mxu0 0
  %235 = vmatpush2.bf16.msra.mxu0 0
  %236 = vmatprep.subr.bf16.mxu0 0
  %237 = vmatpush2.bf16.msra.mxu0 0
  %238 = vmatprep.subr.bf16.mxu0 0
  %239 = vmatpush2.bf16.msra.mxu0 0
  %240 = vmatprep.subr.bf16.mxu0 0
  %241 = vmatpush2.bf16.msra.mxu0 0
  %242 = vmatprep.subr.bf16.mxu0 0
  %243 = vmatpush2.bf16.msra.mxu0 0
  %244 = vmatprep.subr.bf16.mxu0 0
  %245 = vmatpush2.bf16.msra.mxu0 0
  %246 = vmatprep.subr.bf16.mxu0 0
  %247 = vmatpush2.bf16.msra.mxu0 %v156
  %248 = vmatprep.mubr.bf16.mxu0 %v173
  %249 = vmatmul.mubr.bf16.gmra.mxu0 %v168
  %v250 = vpop.f32.mrf.mxu0
  %v251 = vadd.f32 %v163, %v250
  %v252 = vpop.f32.mrf.mxu0
  %v253 = vpop.f32.mrf.mxu0
  %v254 = vpop.f32.mrf.mxu0
  %255 = vdwg.mxu0
  %256 = vst [vmem:[%s3] sm:$0xff] %v210
  %257 = vst [vmem:[%s3 + $0x8] sm:$0xff] %v212
  %258 = vst [vmem:[%s3 + $0x10] sm:$0xff] %v251
  %s259 = scalar_lea.vmem %s2, 32
  %v260 = vld [vmem:[%s259] sm:$0xff]
  %v261 = vld [vmem:[%s259 + $0x8] sm:$0xff]
  %v262 = vld [vmem:[%s259 + $0x10] sm:$0xff]
  %v263 = vld [vmem:[%s259 + $0x18] sm:$0xff]
  %v268 = vunpack.c.l.b16 %v260
  %v269 = vunpack.c.h.b16 %v260
  %v270 = vunpack.c.l.b16 %v261
  %v271 = vunpack.c.l.b16 %v262
  %v272 = vunpack.c.h.b16 %v262
  %v273 = vunpack.c.l.b16 %v263
  %v274 = vpack.c.b16 %v271, %v268
  %v275 = vpack.c.b16 %v272, %v269
  %v276 = vpack.c.b16 %v273, %v270
  %v280 = vunpack.c.h.b16 %v261
  %v281 = vunpack.c.h.b16 %v263
  %v282 = vpack.c.b16 %v281, %v280
  %283 = vrot.lane.b32.xlu0 %v274, 127
  %v284 = vpop.permute.xlu0 %283
  %285 = vrot.lane.b32.xlu0 %v275, 127
  %v286 = vpop.permute.xlu0 %285
  %287 = vrot.lane.b32.xlu0 %v276, 127
  %v288 = vpop.permute.xlu0 %287
  %289 = vrot.lane.b32.xlu0 %v282, 127
  %v290 = vpop.permute.xlu0 %289
  %v291 = vsel %vm48, %v284, %v286
  %v292 = vsel %vm48, %v286, %v288
  %v293 = vsel %vm48, %v288, %v290
  %297 = vrot.lane.b32.xlu0 %v274, 126
  %v298 = vpop.permute.xlu0 %297
  %299 = vrot.lane.b32.xlu0 %v275, 126
  %v300 = vpop.permute.xlu0 %299
  %301 = vrot.lane.b32.xlu0 %v276, 126
  %v302 = vpop.permute.xlu0 %301
  %303 = vrot.lane.b32.xlu0 %v282, 126
  %v304 = vpop.permute.xlu0 %303
  %v305 = vsel %vm63, %v298, %v300
  %v306 = vsel %vm63, %v300, %v302
  %v307 = vsel %vm63, %v302, %v304
  %311 = vrot.lane.b32.xlu0 %v274, 110
  %v312 = vpop.permute.xlu0 %311
  %313 = vrot.lane.b32.xlu0 %v275, 110
  %v314 = vpop.permute.xlu0 %313
  %315 = vrot.lane.b32.xlu0 %v276, 110
  %v316 = vpop.permute.xlu0 %315
  %317 = vrot.lane.b32.xlu0 %v282, 110
  %v318 = vpop.permute.xlu0 %317
  %v319 = vsel %vm78, %v312, %v314
  %v320 = vsel %vm78, %v314, %v316
  %v321 = vsel %vm78, %v316, %v318
  %325 = vrot.lane.b32.xlu0 %v274, 109
  %v326 = vpop.permute.xlu0 %325
  %327 = vrot.lane.b32.xlu0 %v275, 109
  %v328 = vpop.permute.xlu0 %327
  %329 = vrot.lane.b32.xlu0 %v276, 109
  %v330 = vpop.permute.xlu0 %329
  %331 = vrot.lane.b32.xlu0 %v282, 109
  %v332 = vpop.permute.xlu0 %331
  %v333 = vsel %vm93, %v326, %v328
  %v334 = vsel %vm93, %v328, %v330
  %v335 = vsel %vm93, %v330, %v332
  %339 = vrot.lane.b32.xlu0 %v274, 108
  %v340 = vpop.permute.xlu0 %339
  %341 = vrot.lane.b32.xlu0 %v275, 108
  %v342 = vpop.permute.xlu0 %341
  %343 = vrot.lane.b32.xlu0 %v276, 108
  %v344 = vpop.permute.xlu0 %343
  %345 = vrot.lane.b32.xlu0 %v282, 108
  %v346 = vpop.permute.xlu0 %345
  %v347 = vsel %vm108, %v340, %v342
  %v348 = vsel %vm108, %v342, %v344
  %v349 = vsel %vm108, %v344, %v346
  %353 = vrot.lane.b32.xlu0 %v274, 92
  %v354 = vpop.permute.xlu0 %353
  %355 = vrot.lane.b32.xlu0 %v275, 92
  %v356 = vpop.permute.xlu0 %355
  %357 = vrot.lane.b32.xlu0 %v276, 92
  %v358 = vpop.permute.xlu0 %357
  %359 = vrot.lane.b32.xlu0 %v282, 92
  %v360 = vpop.permute.xlu0 %359
  %v361 = vsel %vm123, %v354, %v356
  %v362 = vsel %vm123, %v356, %v358
  %v363 = vsel %vm123, %v358, %v360
  %367 = vrot.lane.b32.xlu0 %v274, 91
  %v368 = vpop.permute.xlu0 %367
  %369 = vrot.lane.b32.xlu0 %v275, 91
  %v370 = vpop.permute.xlu0 %369
  %371 = vrot.lane.b32.xlu0 %v276, 91
  %v372 = vpop.permute.xlu0 %371
  %373 = vrot.lane.b32.xlu0 %v282, 91
  %v374 = vpop.permute.xlu0 %373
  %v375 = vsel %vm138, %v368, %v370
  %v376 = vsel %vm138, %v370, %v372
  %v377 = vsel %vm138, %v372, %v374
  %381 = vrot.lane.b32.xlu0 %v274, 90
  %v382 = vpop.permute.xlu0 %381
  %383 = vrot.lane.b32.xlu0 %v275, 90
  %v384 = vpop.permute.xlu0 %383
  %385 = vrot.lane.b32.xlu0 %v276, 90
  %v386 = vpop.permute.xlu0 %385
  %387 = vrot.lane.b32.xlu0 %v282, 90
  %v388 = vpop.permute.xlu0 %387
  %v389 = vsel %vm153, %v382, %v384
  %v390 = vsel %vm153, %v384, %v386
  %v391 = vsel %vm153, %v386, %v388
  %395 = vmatprep.subr.bf16.mxu0 %v376
  %396 = vmatpush1.bf16.msra.mxu0 %v375
  %397 = vmatprep.subr.bf16.mxu0 %v362
  %398 = vmatpush1.bf16.msra.mxu0 %v361
  %399 = vmatprep.subr.bf16.mxu0 %v348
  %400 = vmatpush1.bf16.msra.mxu0 %v347
  %401 = vmatprep.subr.bf16.mxu0 %v334
  %402 = vmatpush1.bf16.msra.mxu0 %v333
  %403 = vmatprep.subr.bf16.mxu0 %v320
  %404 = vmatpush1.bf16.msra.mxu0 %v319
  %405 = vmatprep.subr.bf16.mxu0 %v306
  %406 = vmatpush1.bf16.msra.mxu0 %v305
  %407 = vmatprep.subr.bf16.mxu0 %v292
  %408 = vmatpush1.bf16.msra.mxu0 %v291
  %409 = vmatprep.subr.bf16.mxu0 %v275
  %410 = vmatpush1.bf16.msra.mxu0 %v274
  %411 = vmatprep.subr.bf16.mxu0 0
  %412 = vmatpush2.bf16.msra.mxu0 0
  %413 = vmatprep.subr.bf16.mxu0 0
  %414 = vmatpush2.bf16.msra.mxu0 0
  %415 = vmatprep.subr.bf16.mxu0 0
  %416 = vmatpush2.bf16.msra.mxu0 0
  %417 = vmatprep.subr.bf16.mxu0 0
  %418 = vmatpush2.bf16.msra.mxu0 0
  %419 = vmatprep.subr.bf16.mxu0 0
  %420 = vmatpush2.bf16.msra.mxu0 0
  %421 = vmatprep.subr.bf16.mxu0 0
  %422 = vmatpush2.bf16.msra.mxu0 0
  %423 = vmatprep.subr.bf16.mxu0 0
  %424 = vmatpush2.bf16.msra.mxu0 0
  %425 = vmatprep.subr.bf16.mxu0 %v390
  %426 = vmatpush2.bf16.msra.mxu0 %v389
  %427 = vmatprep.mubr.bf16.mxu0 %v173
  %428 = vmatmul.mubr.bf16.gmra.mxu0 %v168
  %v429 = vpop.f32.mrf.mxu0
  %v430 = vadd.f32 %v163, %v429
  %v431 = vpop.f32.mrf.mxu0
  %v432 = vadd.f32 %v163, %v431
  %v433 = vpop.f32.mrf.mxu0
  %v434 = vpop.f32.mrf.mxu0
  %435 = vdwg.mxu0
  %436 = vmatprep.subr.bf16.mxu0 0
  %437 = vmatpush1.bf16.msra.mxu0 %v377
  %438 = vmatprep.subr.bf16.mxu0 0
  %439 = vmatpush1.bf16.msra.mxu0 %v363
  %440 = vmatprep.subr.bf16.mxu0 0
  %441 = vmatpush1.bf16.msra.mxu0 %v349
  %442 = vmatprep.subr.bf16.mxu0 0
  %443 = vmatpush1.bf16.msra.mxu0 %v335
  %444 = vmatprep.subr.bf16.mxu0 0
  %445 = vmatpush1.bf16.msra.mxu0 %v321
  %446 = vmatprep.subr.bf16.mxu0 0
  %447 = vmatpush1.bf16.msra.mxu0 %v307
  %448 = vmatprep.subr.bf16.mxu0 0
  %449 = vmatpush1.bf16.msra.mxu0 %v293
  %450 = vmatprep.subr.bf16.mxu0 0
  %451 = vmatpush1.bf16.msra.mxu0 %v276
  %452 = vmatprep.subr.bf16.mxu0 0
  %453 = vmatpush2.bf16.msra.mxu0 0
  %454 = vmatprep.subr.bf16.mxu0 0
  %455 = vmatpush2.bf16.msra.mxu0 0
  %456 = vmatprep.subr.bf16.mxu0 0
  %457 = vmatpush2.bf16.msra.mxu0 0
  %458 = vmatprep.subr.bf16.mxu0 0
  %459 = vmatpush2.bf16.msra.mxu0 0
  %460 = vmatprep.subr.bf16.mxu0 0
  %461 = vmatpush2.bf16.msra.mxu0 0
  %462 = vmatprep.subr.bf16.mxu0 0
  %463 = vmatpush2.bf16.msra.mxu0 0
  %464 = vmatprep.subr.bf16.mxu0 0
  %465 = vmatpush2.bf16.msra.mxu0 0
  %466 = vmatprep.subr.bf16.mxu0 0
  %467 = vmatpush2.bf16.msra.mxu0 %v391
  %468 = vmatprep.mubr.bf16.mxu0 %v173
  %469 = vmatmul.mubr.bf16.gmra.mxu0 %v168
  %v470 = vpop.f32.mrf.mxu0
  %v471 = vadd.f32 %v163, %v470
  %v472 = vpop.f32.mrf.mxu0
  %v473 = vpop.f32.mrf.mxu0
  %v474 = vpop.f32.mrf.mxu0
  %475 = vdwg.mxu0
  %s476 = scalar_lea.vmem %s3, 24
  %477 = vst [vmem:[%s476] sm:$0xff] %v430
  %478 = vst [vmem:[%s476 + $0x8] sm:$0xff] %v432
  %479 = vst [vmem:[%s476 + $0x10] sm:$0xff] %v471
  // Predicated region
  $region14: #{step_layer_forward.1} parent=0 // pred_check
    _
  $region15: #{step_layer_forward.1} parent=0 // pred_check_branch
    %481 = sbr.rel (0) target = $region17
  $region16: #{step_layer_forward.1} parent=0 // pred_region
    _
  $region17: #{step_layer_forward.1} parent=0 // pred_fallthru
    _
  // Predicated region
  $region18: #{step_layer_forward.1} parent=0 // pred_check
    _
  $region19: #{step_layer_forward.1} parent=0 // pred_check_branch
    %483 = sbr.rel (0) target = $region21
  $region20: #{step_layer_forward.1} parent=0 // pred_region
    _
  $region21: #{step_layer_forward.1} parent=0 // pred_fallthru
    _

</llo_original>
